<compile_context>
chip_gen: v5e
topology: v5e:2x2
jax: 0.10.0
libtpu: 0.0.40
codegen_flags: <defaults>
</compile_context>

<pallas_src>
import jax
import jax.numpy as jnp
from jax.experimental import pallas as pl
from jax.experimental.pallas import tpu as pltpu
from functools import partial


def reconstruct_bias_kernel(num_hidden, hidden_dim,
                            conv_mat_ref, x_ref, w_huv_ref, b_huv_ref,
                            w_hid_ref, b_hid_ref, w_out_ref, b_out_ref,
                            o_ref):
    """Batch-on-lanes body: every tensor is (features, TILE_B)."""

    def mm(w, act):
        # bf16 operands, f32 MXU accumulation; elementwise math stays f32.
        return jnp.dot(w, act.astype(w.dtype), preferred_element_type=jnp.float32)

    xT = x_ref[...]                                            # (in_dim, T) bf16

    # Fused input projections: one MXU push + one EUP tanh stream for H|U|V.
    # (A VPU broadcast-FMA alternative exists for the 4-deep contraction but is
    #  only worth it if the MXU result pop is actually exposed -- left as-is.)
    huv = jnp.tanh(mm(w_huv_ref[...], xT) + b_huv_ref[...])    # (3H, T) f32
    H = huv[0:hidden_dim, :]
    U = huv[hidden_dim:2 * hidden_dim, :]
    V = huv[2 * hidden_dim:3 * hidden_dim, :]
    D = V - U   # gate rewritten as H = U + Z * D

    # Gated hidden layers (small num_hidden -> static unroll).
    for i in range(num_hidden):
        Z = jnp.tanh(mm(w_hid_ref[i], H) + b_hid_ref[i])       # (H, T) f32
        H = U + Z * D

    # Output projection (transposed): Y = tanh(W_out^T @ H + b_out^T).
    Y = jnp.tanh(mm(w_out_ref[...], H) + b_out_ref[...])       # (K*out_base, T) f32

    # Strided Conv1d(1,1,K,stride=K,bias=False) folded into a tiny f32 matmul:
    #   out[j, b] = sum_k conv_w[k] * Y[j*K + k, b] == (C @ Y)[j, b]
    o_ref[...] = jnp.dot(conv_mat_ref[...], Y,
                         preferred_element_type=jnp.float32).astype(o_ref.dtype)


def reconstruct_bias_forward(x, kp, *, tile_b=512):
    """x: (B, in_dim) f32; kp: packed params (pack_kernel_params).

    Returns (B, out_base) f32 (== Reconstruct_bais.forward for B > 1)."""
    B, in_dim = x.shape
    num_hidden, hidden, _ = kp["w_hid_t"].shape
    out_base, out_dim_k = kp["conv_mat"].shape

    # Batch tile on the 128-lane axis.  Shrink for small B (avoid a full tile of
    # padding) and prefer >=2 grid steps so both v7x TensorCores get work.
    tile_b = max(128, (int(tile_b) // 128) * 128)
    b_round = ((B + 127) // 128) * 128
    tile_b = min(tile_b, b_round)
    if b_round // 128 >= 2 and pl.cdiv(b_round, tile_b) < 2:
        tile_b = ((pl.cdiv(b_round, 2) + 127) // 128) * 128
    b_pad = pl.cdiv(B, tile_b) * tile_b
    grid = (b_pad // tile_b,)

    # Transposed, bf16, zero-padded input (padded cols give finite tanh(bias)
    # garbage that is sliced off at the end).
    xT = x.astype(jnp.bfloat16).T
    if b_pad != B:
        xT = jnp.pad(xT, ((0, 0), (0, b_pad - B)))

    # VMEM budget: resident (mostly bf16) weights + double-buffered x/out tiles
    # + live f32 intermediates.  Cap generation-aware at ~3/4 of physical VMEM.
    param_bytes = sum(int(v.size) * v.dtype.itemsize for v in kp.values())
    io_bytes = 2 * tile_b * (in_dim * 2 + out_base * 4)
    work_bytes = 4 * tile_b * (4 * hidden + out_dim_k + out_base) * 4
    need = 2 * param_bytes + 2 * io_bytes + work_bytes
    vmem_cap = 64 * 2**20
    try:
        vmem_cap = int(getattr(pltpu.get_tpu_info(), "vmem_capacity_bytes", vmem_cap))
    except Exception:
        pass
    vmem_limit = int(min(max(16 * 2**20, 2 * need), (3 * vmem_cap) // 4))

    outT = pl.pallas_call(
        partial(reconstruct_bias_kernel, num_hidden, hidden),
        out_shape=jax.ShapeDtypeStruct((out_base, b_pad), jnp.float32),
        grid=grid,
        in_specs=[
            pl.BlockSpec((out_base, out_dim_k), lambda i: (0, 0)),            # conv matrix C
            pl.BlockSpec((in_dim, tile_b), lambda i: (0, i)),                 # x^T (pipelined)
            pl.BlockSpec((3 * hidden, in_dim), lambda i: (0, 0)),             # fused (W_in|W_U|W_V)^T
            pl.BlockSpec((3 * hidden, 1), lambda i: (0, 0)),                  # fused biases^T
            pl.BlockSpec((num_hidden, hidden, hidden), lambda i: (0, 0, 0)),  # W_hid^T stack
            pl.BlockSpec((num_hidden, hidden, 1), lambda i: (0, 0, 0)),       # b_hid^T stack
            pl.BlockSpec((out_dim_k, hidden), lambda i: (0, 0)),              # W_out^T
            pl.BlockSpec((out_dim_k, 1), lambda i: (0, 0)),                   # b_out^T
        ],
        out_specs=pl.BlockSpec((out_base, tile_b), lambda i: (0, i)),         # lane-dense output
        compiler_params=pltpu.CompilerParams(
            dimension_semantics=("parallel",),
            vmem_limit_bytes=vmem_limit),
    )(kp["conv_mat"], xT, kp["w_huv_t"], kp["b_huv_t"],
      kp["w_hid_t"], kp["b_hid_t"], kp["w_out_t"], kp["b_out_t"])

    return outT[:, :B].T


def init_params(key, layer_size, kernel_size):
    """Deterministic synthetic parameters, same shapes as the torch module."""
    layer_size = list(layer_size)
    layer_size[-1] *= kernel_size
    input_dim, hidden_dim, output_dim = layer_size[0], layer_size[1], layer_size[-1]
    num_hidden = len(layer_size) - 2

    keys = jax.random.split(key, 11)

    def uni(k, shape, fan_in):
        bound = 1.0 / jnp.sqrt(float(fan_in))
        return jax.random.uniform(k, shape, jnp.float32, -bound, bound)

    params = dict(
        w_in=uni(keys[0], (input_dim, hidden_dim), input_dim),
        b_in=uni(keys[1], (1, hidden_dim), input_dim),
        w_u=uni(keys[2], (input_dim, hidden_dim), input_dim),
        b_u=uni(keys[3], (1, hidden_dim), input_dim),
        w_v=uni(keys[4], (input_dim, hidden_dim), input_dim),
        b_v=uni(keys[5], (1, hidden_dim), input_dim),
        w_hid=uni(keys[6], (num_hidden, hidden_dim, hidden_dim), hidden_dim),
        b_hid=uni(keys[7], (num_hidden, 1, hidden_dim), hidden_dim),
        w_out=uni(keys[8], (hidden_dim, output_dim), hidden_dim),
        b_out=uni(keys[9], (1, output_dim), hidden_dim),
        conv_w=uni(keys[10], (kernel_size,), kernel_size),
    )
    return params, num_hidden


def pack_kernel_params(p, kernel_size):
    """Host-side repacking for the batch-on-lanes kernel:
       fuse the 3 input projections, transpose all weights (bf16), keep biases
       f32, and fold the strided conv into a (out_base, K*out_base) matrix."""
    out_dim_k = p["w_out"].shape[1]
    out_base = out_dim_k // kernel_size

    w_huv = jnp.concatenate([p["w_in"], p["w_u"], p["w_v"]], axis=1)   # (in, 3H)
    b_huv = jnp.concatenate([p["b_in"], p["b_u"], p["b_v"]], axis=1)   # (1, 3H)

    j = jnp.arange(out_base)
    k = jnp.arange(kernel_size)
    conv_mat = jnp.zeros((out_base, out_dim_k), jnp.float32)
    conv_mat = conv_mat.at[j[:, None], j[:, None] * kernel_size + k[None, :]].set(
        jnp.broadcast_to(p["conv_w"][None, :], (out_base, kernel_size)))

    return dict(
        w_huv_t=w_huv.T.astype(jnp.bfloat16),                          # (3H, in)
        b_huv_t=b_huv.T.astype(jnp.float32),                           # (3H, 1)
        w_hid_t=jnp.swapaxes(p["w_hid"], 1, 2).astype(jnp.bfloat16),   # (L, H, H)
        b_hid_t=jnp.swapaxes(p["b_hid"], 1, 2).astype(jnp.float32),    # (L, H, 1)
        w_out_t=p["w_out"].T.astype(jnp.bfloat16),                     # (K*out_base, H)
        b_out_t=p["b_out"].T.astype(jnp.float32),                      # (K*out_base, 1)
        conv_mat=conv_mat,                                             # (out_base, K*out_base)
    )


def reference_forward(x, params, num_hidden, kernel_size):
    """Pure-JAX f32 reference mirroring the PyTorch forward (unpacked params)."""
    H = jnp.tanh(x @ params["w_in"] + params["b_in"])
    U = jnp.tanh(x @ params["w_u"] + params["b_u"])
    V = jnp.tanh(x @ params["w_v"] + params["b_v"])
    for i in range(num_hidden):
        Z = jnp.tanh(H @ params["w_hid"][i] + params["b_hid"][i])
        H = (1.0 - Z) * U + Z * V
    Y = jnp.tanh(H @ params["w_out"] + params["b_out"])
    B, L = Y.shape
    out_base = L // kernel_size
    return jnp.einsum("bjk,k->bj",
                      Y.reshape(B, out_base, kernel_size), params["conv_w"])


def reference_forward_bf16(x, params, num_hidden, kernel_size):
    """Same forward, but with bf16 matmul operands / f32 accumulation, matching
    the kernel's numerics (structural correctness check at tight tolerance)."""
    bf = jnp.bfloat16

    def mm(a, w):
        return jnp.dot(a.astype(bf), w.astype(bf), preferred_element_type=jnp.float32)

    H = jnp.tanh(mm(x, params["w_in"]) + params["b_in"])
    U = jnp.tanh(mm(x, params["w_u"]) + params["b_u"])
    V = jnp.tanh(mm(x, params["w_v"]) + params["b_v"])
    for i in range(num_hidden):
        Z = jnp.tanh(mm(H, params["w_hid"][i]) + params["b_hid"][i])
        H = (1.0 - Z) * U + Z * V
    Y = jnp.tanh(mm(H, params["w_out"]) + params["b_out"])
    B, L = Y.shape
    out_base = L // kernel_size
    return jnp.einsum("bjk,k->bj",
                      Y.reshape(B, out_base, kernel_size), params["conv_w"])


if __name__ == "__main__":
    # layer_size=[4, 32, 32, 32, 4], K=4; batch non-multiple of 128 to exercise
    # padding and a multi-step ("parallel") batch grid.
    layer_size = [4, 32, 32, 32, 4]
    kernel_size = 4
    batch = 300

    key = jax.random.PRNGKey(0)
    pkey, xkey = jax.random.split(key)
    raw_params, num_hidden = init_params(pkey, layer_size, kernel_size)
    kernel_params = pack_kernel_params(raw_params, kernel_size)

    x = jax.random.normal(xkey, (batch, layer_size[0]), jnp.float32)

    out = reconstruct_bias_forward(x, kernel_params, tile_b=512)
    out = jax.block_until_ready(out)

    ref_bf16 = reference_forward_bf16(x, raw_params, num_hidden, kernel_size)
    ref_f32 = reference_forward(x, raw_params, num_hidden, kernel_size)

    assert out.shape == (batch, layer_size[-1]), out.shape
    err_bf = float(jnp.max(jnp.abs(out - ref_bf16)))
    err_32 = float(jnp.max(jnp.abs(out - ref_f32)))
    # Tight structural check vs the bf16-matmul reference; loose check vs pure f32
    # (the only difference there is the intended bf16 operand rounding).
    assert err_bf < 5e-3, f"bf16-emulated reference mismatch: {err_bf}"
    assert err_32 < 5e-2, f"f32 reference mismatch: {err_32}"

    print("KERNEL_OK")
</pallas_src>

<mosaic_0001>
module attributes {stable_mosaic.version = 11 : i64} {
  func.func @reconstruct_bias_kernel(%arg0: i32, %arg1: memref<4x16xf32, #tpu.memory_space<vmem>>, %arg2: memref<4x256xbf16, #tpu.memory_space<vmem>>, %arg3: memref<96x4xbf16, #tpu.memory_space<vmem>>, %arg4: memref<96x1xf32, #tpu.memory_space<vmem>>, %arg5: memref<3x32x32xbf16, #tpu.memory_space<vmem>>, %arg6: memref<3x32x1xf32, #tpu.memory_space<vmem>>, %arg7: memref<16x32xbf16, #tpu.memory_space<vmem>>, %arg8: memref<16x1xf32, #tpu.memory_space<vmem>>, %arg9: memref<4x256xf32, #tpu.memory_space<vmem>>) attributes {dimension_semantics = [#tpu.dimension_semantics<parallel>], iteration_bounds = array<i64: 2>, scalar_prefetch = 0 : i64, scratch_operands = 0 : i64, tpu.core_type = #tpu.core_type<tc>, window_params = [{pipeline_mode = #tpu.pipeline_mode<synchronous>, transform_indices = @transform_0, window_bounds = array<i64: 4, 16>}, {transform_indices = @transform_1, window_bounds = array<i64: 4, 256>}, {pipeline_mode = #tpu.pipeline_mode<synchronous>, transform_indices = @transform_2, window_bounds = array<i64: 96, 4>}, {pipeline_mode = #tpu.pipeline_mode<synchronous>, transform_indices = @transform_3, window_bounds = array<i64: 96, 1>}, {pipeline_mode = #tpu.pipeline_mode<synchronous>, transform_indices = @transform_4, window_bounds = array<i64: 3, 32, 32>}, {pipeline_mode = #tpu.pipeline_mode<synchronous>, transform_indices = @transform_5, window_bounds = array<i64: 3, 32, 1>}, {pipeline_mode = #tpu.pipeline_mode<synchronous>, transform_indices = @transform_6, window_bounds = array<i64: 16, 32>}, {pipeline_mode = #tpu.pipeline_mode<synchronous>, transform_indices = @transform_7, window_bounds = array<i64: 16, 1>}, {transform_indices = @transform_8, window_bounds = array<i64: 4, 256>}]} {
    %c0 = arith.constant 0 : index
    %c0_0 = arith.constant 0 : index
    %0 = vector.load %arg2[%c0, %c0_0] : memref<4x256xbf16, #tpu.memory_space<vmem>>, vector<4x256xbf16>
    %c0_1 = arith.constant 0 : index
    %c0_2 = arith.constant 0 : index
    %1 = vector.load %arg3[%c0_1, %c0_2] : memref<96x4xbf16, #tpu.memory_space<vmem>>, vector<96x4xbf16>
    %cst = arith.constant dense<0.000000e+00> : vector<96x256xf32>
    %2 = tpu.matmul %1, %0, %cst {dimension_numbers = #tpu.dot_dimension_numbers<[1], [0], [0], [1], [0, 0, 1, 1], [], []>} : vector<96x4xbf16>, vector<4x256xbf16>, vector<96x256xf32> -> vector<96x256xf32>
    %c0_3 = arith.constant 0 : index
    %c0_4 = arith.constant 0 : index
    %3 = vector.load %arg4[%c0_3, %c0_4] : memref<96x1xf32, #tpu.memory_space<vmem>>, vector<96x1xf32>
    %4 = vector.broadcast %3 : vector<96x1xf32> to vector<96x256xf32>
    %5 = arith.addf %2, %4 : vector<96x256xf32>
    %6 = math.tanh %5 : vector<96x256xf32>
    %7 = vector.extract_strided_slice %6 {offsets = [0, 0], sizes = [32, 256], strides = [1, 1]} : vector<96x256xf32> to vector<32x256xf32>
    %8 = vector.extract_strided_slice %6 {offsets = [32, 0], sizes = [32, 256], strides = [1, 1]} : vector<96x256xf32> to vector<32x256xf32>
    %9 = vector.extract_strided_slice %6 {offsets = [64, 0], sizes = [32, 256], strides = [1, 1]} : vector<96x256xf32> to vector<32x256xf32>
    %10 = arith.subf %9, %8 : vector<32x256xf32>
    %c0_5 = arith.constant 0 : index
    %c0_6 = arith.constant 0 : index
    %c0_7 = arith.constant 0 : index
    %11 = vector.load %arg5[%c0_5, %c0_6, %c0_7] : memref<3x32x32xbf16, #tpu.memory_space<vmem>>, vector<1x32x32xbf16>
    %12 = vector.shape_cast %11 : vector<1x32x32xbf16> to vector<32x32xbf16>
    %13 = arith.truncf %7 : vector<32x256xf32> to vector<32x256xbf16>
    %cst_8 = arith.constant dense<0.000000e+00> : vector<32x256xf32>
    %14 = tpu.matmul %12, %13, %cst_8 {dimension_numbers = #tpu.dot_dimension_numbers<[1], [0], [0], [1], [0, 0, 1, 1], [], []>} : vector<32x32xbf16>, vector<32x256xbf16>, vector<32x256xf32> -> vector<32x256xf32>
    %c0_9 = arith.constant 0 : index
    %c0_10 = arith.constant 0 : index
    %c0_11 = arith.constant 0 : index
    %15 = vector.load %arg6[%c0_9, %c0_10, %c0_11] : memref<3x32x1xf32, #tpu.memory_space<vmem>>, vector<1x32x1xf32>
    %16 = vector.shape_cast %15 : vector<1x32x1xf32> to vector<32x1xf32>
    %17 = vector.broadcast %16 : vector<32x1xf32> to vector<32x256xf32>
    %18 = arith.addf %14, %17 : vector<32x256xf32>
    %19 = math.tanh %18 : vector<32x256xf32>
    %20 = arith.mulf %19, %10 : vector<32x256xf32>
    %21 = arith.addf %8, %20 : vector<32x256xf32>
    %c1 = arith.constant 1 : index
    %c0_12 = arith.constant 0 : index
    %c0_13 = arith.constant 0 : index
    %22 = vector.load %arg5[%c1, %c0_12, %c0_13] : memref<3x32x32xbf16, #tpu.memory_space<vmem>>, vector<1x32x32xbf16>
    %23 = vector.shape_cast %22 : vector<1x32x32xbf16> to vector<32x32xbf16>
    %24 = arith.truncf %21 : vector<32x256xf32> to vector<32x256xbf16>
    %cst_14 = arith.constant dense<0.000000e+00> : vector<32x256xf32>
    %25 = tpu.matmul %23, %24, %cst_14 {dimension_numbers = #tpu.dot_dimension_numbers<[1], [0], [0], [1], [0, 0, 1, 1], [], []>} : vector<32x32xbf16>, vector<32x256xbf16>, vector<32x256xf32> -> vector<32x256xf32>
    %c1_15 = arith.constant 1 : index
    %c0_16 = arith.constant 0 : index
    %c0_17 = arith.constant 0 : index
    %26 = vector.load %arg6[%c1_15, %c0_16, %c0_17] : memref<3x32x1xf32, #tpu.memory_space<vmem>>, vector<1x32x1xf32>
    %27 = vector.shape_cast %26 : vector<1x32x1xf32> to vector<32x1xf32>
    %28 = vector.broadcast %27 : vector<32x1xf32> to vector<32x256xf32>
    %29 = arith.addf %25, %28 : vector<32x256xf32>
    %30 = math.tanh %29 : vector<32x256xf32>
    %31 = arith.mulf %30, %10 : vector<32x256xf32>
    %32 = arith.addf %8, %31 : vector<32x256xf32>
    %c2 = arith.constant 2 : index
    %c0_18 = arith.constant 0 : index
    %c0_19 = arith.constant 0 : index
    %33 = vector.load %arg5[%c2, %c0_18, %c0_19] : memref<3x32x32xbf16, #tpu.memory_space<vmem>>, vector<1x32x32xbf16>
    %34 = vector.shape_cast %33 : vector<1x32x32xbf16> to vector<32x32xbf16>
    %35 = arith.truncf %32 : vector<32x256xf32> to vector<32x256xbf16>
    %cst_20 = arith.constant dense<0.000000e+00> : vector<32x256xf32>
    %36 = tpu.matmul %34, %35, %cst_20 {dimension_numbers = #tpu.dot_dimension_numbers<[1], [0], [0], [1], [0, 0, 1, 1], [], []>} : vector<32x32xbf16>, vector<32x256xbf16>, vector<32x256xf32> -> vector<32x256xf32>
    %c2_21 = arith.constant 2 : index
    %c0_22 = arith.constant 0 : index
    %c0_23 = arith.constant 0 : index
    %37 = vector.load %arg6[%c2_21, %c0_22, %c0_23] : memref<3x32x1xf32, #tpu.memory_space<vmem>>, vector<1x32x1xf32>
    %38 = vector.shape_cast %37 : vector<1x32x1xf32> to vector<32x1xf32>
    %39 = vector.broadcast %38 : vector<32x1xf32> to vector<32x256xf32>
    %40 = arith.addf %36, %39 : vector<32x256xf32>
    %41 = math.tanh %40 : vector<32x256xf32>
    %42 = arith.mulf %41, %10 : vector<32x256xf32>
    %43 = arith.addf %8, %42 : vector<32x256xf32>
    %c0_24 = arith.constant 0 : index
    %c0_25 = arith.constant 0 : index
    %44 = vector.load %arg7[%c0_24, %c0_25] : memref<16x32xbf16, #tpu.memory_space<vmem>>, vector<16x32xbf16>
    %45 = arith.truncf %43 : vector<32x256xf32> to vector<32x256xbf16>
    %cst_26 = arith.constant dense<0.000000e+00> : vector<16x256xf32>
    %46 = tpu.matmul %44, %45, %cst_26 {dimension_numbers = #tpu.dot_dimension_numbers<[1], [0], [0], [1], [0, 0, 1, 1], [], []>} : vector<16x32xbf16>, vector<32x256xbf16>, vector<16x256xf32> -> vector<16x256xf32>
    %c0_27 = arith.constant 0 : index
    %c0_28 = arith.constant 0 : index
    %47 = vector.load %arg8[%c0_27, %c0_28] : memref<16x1xf32, #tpu.memory_space<vmem>>, vector<16x1xf32>
    %48 = vector.broadcast %47 : vector<16x1xf32> to vector<16x256xf32>
    %49 = arith.addf %46, %48 : vector<16x256xf32>
    %50 = math.tanh %49 : vector<16x256xf32>
    %c0_29 = arith.constant 0 : index
    %c0_30 = arith.constant 0 : index
    %51 = vector.load %arg1[%c0_29, %c0_30] : memref<4x16xf32, #tpu.memory_space<vmem>>, vector<4x16xf32>
    %cst_31 = arith.constant dense<0.000000e+00> : vector<4x256xf32>
    %52 = tpu.matmul %51, %50, %cst_31 {dimension_numbers = #tpu.dot_dimension_numbers<[1], [0], [0], [1], [0, 0, 1, 1], [], []>} : vector<4x16xf32>, vector<16x256xf32>, vector<4x256xf32> -> vector<4x256xf32>
    %c0_32 = arith.constant 0 : index
    %c0_33 = arith.constant 0 : index
    %53 = vector.load %arg9[%c0_32, %c0_33] : memref<4x256xf32, #tpu.memory_space<vmem>>, vector<4x256xf32>
    tpu.vector_store %arg9[%c0_32, %c0_33], %52 {strides = array<i32>} : memref<4x256xf32, #tpu.memory_space<vmem>>, vector<4x256xf32>,
    return
  }
  func.func @transform_0(%arg0: i32) -> (i32, i32) {
    %c0_i32 = arith.constant 0 : i32
    %c0_i32_0 = arith.constant 0 : i32
    %c0_i32_1 = arith.constant 0 : i32
    return %c0_i32, %c0_i32_0 : i32, i32
  }
  func.func @transform_1(%arg0: i32) -> (i32, i32) {
    %c0_i32 = arith.constant 0 : i32
    %c0_i32_0 = arith.constant 0 : i32
    return %c0_i32, %arg0 : i32, i32
  }
  func.func @transform_2(%arg0: i32) -> (i32, i32) {
    %c0_i32 = arith.constant 0 : i32
    %c0_i32_0 = arith.constant 0 : i32
    %c0_i32_1 = arith.constant 0 : i32
    return %c0_i32, %c0_i32_0 : i32, i32
  }
  func.func @transform_3(%arg0: i32) -> (i32, i32) {
    %c0_i32 = arith.constant 0 : i32
    %c0_i32_0 = arith.constant 0 : i32
    %c0_i32_1 = arith.constant 0 : i32
    return %c0_i32, %c0_i32_0 : i32, i32
  }
  func.func @transform_4(%arg0: i32) -> (i32, i32, i32) {
    %c0_i32 = arith.constant 0 : i32
    %c0_i32_0 = arith.constant 0 : i32
    %c0_i32_1 = arith.constant 0 : i32
    %c0_i32_2 = arith.constant 0 : i32
    return %c0_i32, %c0_i32_0, %c0_i32_1 : i32, i32, i32
  }
  func.func @transform_5(%arg0: i32) -> (i32, i32, i32) {
    %c0_i32 = arith.constant 0 : i32
    %c0_i32_0 = arith.constant 0 : i32
    %c0_i32_1 = arith.constant 0 : i32
    %c0_i32_2 = arith.constant 0 : i32
    return %c0_i32, %c0_i32_0, %c0_i32_1 : i32, i32, i32
  }
  func.func @transform_6(%arg0: i32) -> (i32, i32) {
    %c0_i32 = arith.constant 0 : i32
    %c0_i32_0 = arith.constant 0 : i32
    %c0_i32_1 = arith.constant 0 : i32
    return %c0_i32, %c0_i32_0 : i32, i32
  }
  func.func @transform_7(%arg0: i32) -> (i32, i32) {
    %c0_i32 = arith.constant 0 : i32
    %c0_i32_0 = arith.constant 0 : i32
    %c0_i32_1 = arith.constant 0 : i32
    return %c0_i32, %c0_i32_0 : i32, i32
  }
  func.func @transform_8(%arg0: i32) -> (i32, i32) {
    %c0_i32 = arith.constant 0 : i32
    %c0_i32_0 = arith.constant 0 : i32
    return %c0_i32, %arg0 : i32, i32
  }
}

</mosaic_0001>

<llo_original>
// kernel: tpu_custom_call.1
$region0: #{tpu_custom_call.1}
  #allocation0 [shape = 'u32[]', space=smem, size = 0x4, offset = 0x4, fixed_abs, tag = 'smem constant byte address 0x4 - core index']
  #allocation1 [shape = 'u32[72,128]{1,0:T(1,128)}', space=vmem, size = 0x9000, scoped, tag = 'internal scratch']
  %s0 = inlined_call_operand.vmem [shape: f32[4,16], index: 0, kind: input, shape index: {}]
  %s1 = inlined_call_operand.vmem [shape: bf16[4,512], index: 1, kind: input, shape index: {}]
  %s2 = inlined_call_operand.vmem [shape: bf16[96,4], index: 2, kind: input, shape index: {}]
  %s3 = inlined_call_operand.vmem [shape: f32[96,1], index: 3, kind: input, shape index: {}]
  %s4 = inlined_call_operand.vmem [shape: bf16[3,32,32], index: 4, kind: input, shape index: {}]
  %s5 = inlined_call_operand.vmem [shape: f32[3,32,1], index: 5, kind: input, shape index: {}]
  %s6 = inlined_call_operand.vmem [shape: bf16[16,32], index: 6, kind: input, shape index: {}]
  %s7 = inlined_call_operand.vmem [shape: f32[16,1], index: 7, kind: input, shape index: {}]
  %s8 = inlined_call_operand.hbm [shape: f32[4,512], index: 8, kind: output, shape index: {}]
  %s9 = sld [smem:[#allocation0]]
  $region65: #{tpu_custom_call.1} parent=0
    _
  %s11 = ssub.s32 1, %s9
  %s12 = scalar_select 0, %s11, %s9
  $region1: #{tpu_custom_call.1} parent=0
    #allocation2 [shape = 'u8[8192]{0}', space=vmem, size = 0x2000, scoped, tag = 'output window, operand 0']
    #allocation3 [shape = 's32[2]{0}', space=sflag, size = 0x8, scoped, tag = 'scoped memory for tpu_custom_call.1']
    %13 = vsyncpa [#allocation3], 0
    %s14 = scalar_lea.sflag [#allocation3], 1
    %15 = vsyncpa %s14, 0
    loop: start=0, step=1, limit=4
    $region2: #{tpu_custom_call.1} parent=1 // loop_pre_header
      _
    $region3: #{tpu_custom_call.1} parent=1 // loop_header
      %s17 = sphi 0, %s21
      %p18 = scmp.ge.s32.totalorder %s17, 4
      %s25 = sphi 0, %s25
      %s27 = sphi 0, %s25
      %s28 = sphi 0, %s27
      %s42 = sphi 0, %s28
      %s48 = sphi 0, %s50
      %s51 = sphi 0, %s48
      %s52 = sphi 0, %s51
      %s68 = sphi 0, %s52
      %s72 = sphi 0, %s72
      %s74 = sphi 0, %s72
      %s75 = sphi 0, %s74
      %s89 = sphi 0, %s75
      %s93 = sphi 0, %s93
      %s95 = sphi 0, %s93
      %s96 = sphi 0, %s95
      %s110 = sphi 0, %s96
      %s114 = sphi 0, %s114
      %s116 = sphi 0, %s114
      %s117 = sphi 0, %s116
      %s131 = sphi 0, %s117
      %s135 = sphi 0, %s135
      %s137 = sphi 0, %s135
      %s138 = sphi 0, %s137
      %s152 = sphi 0, %s138
      %s156 = sphi 0, %s156
      %s158 = sphi 0, %s156
      %s159 = sphi 0, %s158
      %s173 = sphi 0, %s159
      %s177 = sphi 0, %s177
      %s179 = sphi 0, %s177
      %s180 = sphi 0, %s179
      %s194 = sphi 0, %s180
      %s200 = sphi 0, %s202
      %s203 = sphi 0, %s200
      %s204 = sphi 0, %s203
      %s220 = sphi 0, %s204
    $region4: #{tpu_custom_call.1} parent=1 // loop_header_branch
      %20 = sbr.rel (%p18) target = $region8
    $region5: #{tpu_custom_call.1} parent=1 // loop_body
      %s22 = ssub.s32 %s17, 1
      %s23 = ssub.s32 %s17, 2
      %s24 = sadd.s32 %s17, 1
      %s26 = sadd.s32 %s25, 1
      %p29 = scmp.eq.s32.totalorder %s17, 1
      %p30 = scmp.ne.s32.totalorder %s25, %s27
      %p31 = scmp.eq.s32.totalorder %s17, 0
      %p32 = por %p30, %p31
      %p33 = scmp.ne.s32.totalorder %s25, %s27
      %p34 = scmp.eq.s32.totalorder %s22, 1
      %p35 = por %p33, %p34
      %p36 = scmp.ne.s32.totalorder %s27, %s28
      %p37 = scmp.eq.s32.totalorder %s22, 0
      %p38 = por %p36, %p37
      %p39 = scmp.ne.s32.totalorder %s27, %s28
      %p40 = scmp.eq.s32.totalorder %s23, 1
      %p41 = por %p39, %p40
      %p43 = scmp.ne.s32.totalorder %s28, %s42
      %p44 = scmp.eq.s32.totalorder %s23, 0
      %p45 = por %p43, %p44
      %s46 = ssub.s32 %s17, %s24
      %p47 = scmp.eq.s32.totalorder %s46, 0
      %s49 = sadd.s32 %s48, 1
      %s50 = scalar_select %p47, %s48, %s49
      %p53 = pneg %p47
      %p54 = scmp.eq.s32.totalorder %s17, 1
      %p55 = por %p53, %p54
      %p56 = scmp.ne.s32.totalorder %s48, %s51
      %p57 = scmp.eq.s32.totalorder %s17, 0
      %p58 = por %p56, %p57
      %p59 = scmp.ne.s32.totalorder %s48, %s51
      %p60 = scmp.eq.s32.totalorder %s22, 1
      %p61 = por %p59, %p60
      %p62 = scmp.ne.s32.totalorder %s51, %s52
      %p63 = scmp.eq.s32.totalorder %s22, 0
      %p64 = por %p62, %p63
      %p65 = scmp.ne.s32.totalorder %s51, %s52
      %p66 = scmp.eq.s32.totalorder %s23, 1
      %p67 = por %p65, %p66
      %p69 = scmp.ne.s32.totalorder %s52, %s68
      %p70 = scmp.eq.s32.totalorder %s23, 0
      %p71 = por %p69, %p70
      %s73 = sadd.s32 %s72, 1
      %p76 = scmp.eq.s32.totalorder %s17, 1
      %p77 = scmp.ne.s32.totalorder %s72, %s74
      %p78 = scmp.eq.s32.totalorder %s17, 0
      %p79 = por %p77, %p78
      %p80 = scmp.ne.s32.totalorder %s72, %s74
      %p81 = scmp.eq.s32.totalorder %s22, 1
      %p82 = por %p80, %p81
      %p83 = scmp.ne.s32.totalorder %s74, %s75
      %p84 = scmp.eq.s32.totalorder %s22, 0
      %p85 = por %p83, %p84
      %p86 = scmp.ne.s32.totalorder %s74, %s75
      %p87 = scmp.eq.s32.totalorder %s23, 1
      %p88 = por %p86, %p87
      %p90 = scmp.ne.s32.totalorder %s75, %s89
      %p91 = scmp.eq.s32.totalorder %s23, 0
      %p92 = por %p90, %p91
      %s94 = sadd.s32 %s93, 1
      %p97 = scmp.eq.s32.totalorder %s17, 1
      %p98 = scmp.ne.s32.totalorder %s93, %s95
      %p99 = scmp.eq.s32.totalorder %s17, 0
      %p100 = por %p98, %p99
      %p101 = scmp.ne.s32.totalorder %s93, %s95
      %p102 = scmp.eq.s32.totalorder %s22, 1
      %p103 = por %p101, %p102
      %p104 = scmp.ne.s32.totalorder %s95, %s96
      %p105 = scmp.eq.s32.totalorder %s22, 0
      %p106 = por %p104, %p105
      %p107 = scmp.ne.s32.totalorder %s95, %s96
      %p108 = scmp.eq.s32.totalorder %s23, 1
      %p109 = por %p107, %p108
      %p111 = scmp.ne.s32.totalorder %s96, %s110
      %p112 = scmp.eq.s32.totalorder %s23, 0
      %p113 = por %p111, %p112
      %s115 = sadd.s32 %s114, 1
      %p118 = scmp.eq.s32.totalorder %s17, 1
      %p119 = scmp.ne.s32.totalorder %s114, %s116
      %p120 = scmp.eq.s32.totalorder %s17, 0
      %p121 = por %p119, %p120
      %p122 = scmp.ne.s32.totalorder %s114, %s116
      %p123 = scmp.eq.s32.totalorder %s22, 1
      %p124 = por %p122, %p123
      %p125 = scmp.ne.s32.totalorder %s116, %s117
      %p126 = scmp.eq.s32.totalorder %s22, 0
      %p127 = por %p125, %p126
      %p128 = scmp.ne.s32.totalorder %s116, %s117
      %p129 = scmp.eq.s32.totalorder %s23, 1
      %p130 = por %p128, %p129
      %p132 = scmp.ne.s32.totalorder %s117, %s131
      %p133 = scmp.eq.s32.totalorder %s23, 0
      %p134 = por %p132, %p133
      %s136 = sadd.s32 %s135, 1
      %p139 = scmp.eq.s32.totalorder %s17, 1
      %p140 = scmp.ne.s32.totalorder %s135, %s137
      %p141 = scmp.eq.s32.totalorder %s17, 0
      %p142 = por %p140, %p141
      %p143 = scmp.ne.s32.totalorder %s135, %s137
      %p144 = scmp.eq.s32.totalorder %s22, 1
      %p145 = por %p143, %p144
      %p146 = scmp.ne.s32.totalorder %s137, %s138
      %p147 = scmp.eq.s32.totalorder %s22, 0
      %p148 = por %p146, %p147
      %p149 = scmp.ne.s32.totalorder %s137, %s138
      %p150 = scmp.eq.s32.totalorder %s23, 1
      %p151 = por %p149, %p150
      %p153 = scmp.ne.s32.totalorder %s138, %s152
      %p154 = scmp.eq.s32.totalorder %s23, 0
      %p155 = por %p153, %p154
      %s157 = sadd.s32 %s156, 1
      %p160 = scmp.eq.s32.totalorder %s17, 1
      %p161 = scmp.ne.s32.totalorder %s156, %s158
      %p162 = scmp.eq.s32.totalorder %s17, 0
      %p163 = por %p161, %p162
      %p164 = scmp.ne.s32.totalorder %s156, %s158
      %p165 = scmp.eq.s32.totalorder %s22, 1
      %p166 = por %p164, %p165
      %p167 = scmp.ne.s32.totalorder %s158, %s159
      %p168 = scmp.eq.s32.totalorder %s22, 0
      %p169 = por %p167, %p168
      %p170 = scmp.ne.s32.totalorder %s158, %s159
      %p171 = scmp.eq.s32.totalorder %s23, 1
      %p172 = por %p170, %p171
      %p174 = scmp.ne.s32.totalorder %s159, %s173
      %p175 = scmp.eq.s32.totalorder %s23, 0
      %p176 = por %p174, %p175
      %s178 = sadd.s32 %s177, 1
      %p181 = scmp.eq.s32.totalorder %s17, 1
      %p182 = scmp.ne.s32.totalorder %s177, %s179
      %p183 = scmp.eq.s32.totalorder %s17, 0
      %p184 = por %p182, %p183
      %p185 = scmp.ne.s32.totalorder %s177, %s179
      %p186 = scmp.eq.s32.totalorder %s22, 1
      %p187 = por %p185, %p186
      %p188 = scmp.ne.s32.totalorder %s179, %s180
      %p189 = scmp.eq.s32.totalorder %s22, 0
      %p190 = por %p188, %p189
      %p191 = scmp.ne.s32.totalorder %s179, %s180
      %p192 = scmp.eq.s32.totalorder %s23, 1
      %p193 = por %p191, %p192
      %p195 = scmp.ne.s32.totalorder %s180, %s194
      %p196 = scmp.eq.s32.totalorder %s23, 0
      %p197 = por %p195, %p196
      %s198 = ssub.s32 %s17, %s24
      %p199 = scmp.eq.s32.totalorder %s198, 0
      %s201 = sadd.s32 %s200, 1
      %s202 = scalar_select %p199, %s200, %s201
      %p205 = pneg %p199
      %p206 = scmp.eq.s32.totalorder %s17, 1
      %p207 = por %p205, %p206
      %p208 = scmp.ne.s32.totalorder %s200, %s203
      %p209 = scmp.eq.s32.totalorder %s17, 0
      %p210 = por %p208, %p209
      %p211 = scmp.ne.s32.totalorder %s200, %s203
      %p212 = scmp.eq.s32.totalorder %s22, 1
      %p213 = por %p211, %p212
      %p214 = scmp.ne.s32.totalorder %s203, %s204
      %p215 = scmp.eq.s32.totalorder %s22, 0
      %p216 = por %p214, %p215
      %p217 = scmp.ne.s32.totalorder %s203, %s204
      %p218 = scmp.eq.s32.totalorder %s23, 1
      %p219 = por %p217, %p218
      %p221 = scmp.ne.s32.totalorder %s204, %s220
      %p222 = scmp.eq.s32.totalorder %s23, 0
      %p223 = por %p221, %p222
      %p224 = scmp.le.s32.totalorder 1, %s17
      %p225 = scmp.lt.s32.totalorder %s17, 3
      %p226 = pnand %p224, %p225
      %p227 = pneg %p226
      // Predicated region
      $region9: #{tpu_custom_call.1} parent=5 // pred_check
        _
      $region10: #{tpu_custom_call.1} parent=5 // pred_check_branch
        %229 = sbr.rel (%p226) target = $region12
      $region11: #{tpu_custom_call.1} parent=5 // pred_region
        %s230 = ssub.s32 %s17, 1
        // Predicated region
        $region13: #{tpu_custom_call.1} parent=11 // pred_check
          %p231 = pneg %p38
        $region14: #{tpu_custom_call.1} parent=11 // pred_check_branch
          %233 = sbr.rel (%p231) target = $region16
        $region15: #{tpu_custom_call.1} parent=11 // pred_region
          _
        $region16: #{tpu_custom_call.1} parent=11 // pred_fallthru
          _
        // Predicated region
        $region17: #{tpu_custom_call.1} parent=11 // pred_check
          %p234 = pneg %p85
        $region18: #{tpu_custom_call.1} parent=11 // pred_check_branch
          %236 = sbr.rel (%p234) target = $region20
        $region19: #{tpu_custom_call.1} parent=11 // pred_region
          _
        $region20: #{tpu_custom_call.1} parent=11 // pred_fallthru
          _
        // Predicated region
        $region21: #{tpu_custom_call.1} parent=11 // pred_check
          %p237 = pneg %p106
        $region22: #{tpu_custom_call.1} parent=11 // pred_check_branch
          %239 = sbr.rel (%p237) target = $region24
        $region23: #{tpu_custom_call.1} parent=11 // pred_region
          _
        $region24: #{tpu_custom_call.1} parent=11 // pred_fallthru
          _
        // Predicated region
        $region25: #{tpu_custom_call.1} parent=11 // pred_check
          %p240 = pneg %p127
        $region26: #{tpu_custom_call.1} parent=11 // pred_check_branch
          %242 = sbr.rel (%p240) target = $region28
        $region27: #{tpu_custom_call.1} parent=11 // pred_region
          _
        $region28: #{tpu_custom_call.1} parent=11 // pred_fallthru
          _
        // Predicated region
        $region29: #{tpu_custom_call.1} parent=11 // pred_check
          %p243 = pneg %p148
        $region30: #{tpu_custom_call.1} parent=11 // pred_check_branch
          %245 = sbr.rel (%p243) target = $region32
        $region31: #{tpu_custom_call.1} parent=11 // pred_region
          _
        $region32: #{tpu_custom_call.1} parent=11 // pred_fallthru
          _
        // Predicated region
        $region33: #{tpu_custom_call.1} parent=11 // pred_check
          %p246 = pneg %p169
        $region34: #{tpu_custom_call.1} parent=11 // pred_check_branch
          %248 = sbr.rel (%p246) target = $region36
        $region35: #{tpu_custom_call.1} parent=11 // pred_region
          _
        $region36: #{tpu_custom_call.1} parent=11 // pred_fallthru
          _
        // Predicated region
        $region37: #{tpu_custom_call.1} parent=11 // pred_check
          %p249 = pneg %p190
        $region38: #{tpu_custom_call.1} parent=11 // pred_check_branch
          %251 = sbr.rel (%p249) target = $region40
        $region39: #{tpu_custom_call.1} parent=11 // pred_region
          _
        $region40: #{tpu_custom_call.1} parent=11 // pred_fallthru
          _
      $region12: #{tpu_custom_call.1} parent=5 // pred_fallthru
        _
      %p252 = scmp.lt.s32.totalorder %s17, 2
      // Predicated region
      $region41: #{tpu_custom_call.1} parent=5 // pred_check
        %p253 = pneg %p252
      $region42: #{tpu_custom_call.1} parent=5 // pred_check_branch
        %255 = sbr.rel (%p253) target = $region44
      $region43: #{tpu_custom_call.1} parent=5 // pred_region
        // Predicated region
        $region45: #{tpu_custom_call.1} parent=43 // pred_check
          %p256 = pneg %p58
        $region46: #{tpu_custom_call.1} parent=43 // pred_check_branch
          %258 = sbr.rel (%p256) target = $region48
        $region47: #{tpu_custom_call.1} parent=43 // pred_region
          %s259 = smul.u32 2, %s17
          %p260 = scmp.lt.s32.totalorder %s259, 3
          %s261 = scalar_select %p260, %s259, 3
          %s262 = smul.addr %s261, 2
          %s263 = scalar_lea.vmem %s1, %s262
          %s264 = smul.u32 2, %s17
        $region48: #{tpu_custom_call.1} parent=43 // pred_fallthru
          _
      $region44: #{tpu_custom_call.1} parent=5 // pred_fallthru
        _
      %p265 = scmp.le.s32.totalorder 1, %s17
      %p266 = scmp.lt.s32.totalorder %s17, 3
      %p267 = pnand %p265, %p266
      %p268 = pneg %p267
      // Predicated region
      $region49: #{tpu_custom_call.1} parent=5 // pred_check
        _
      $region50: #{tpu_custom_call.1} parent=5 // pred_check_branch
        %270 = sbr.rel (%p267) target = $region52
      $region51: #{tpu_custom_call.1} parent=5 // pred_region
        %s271 = ssub.s32 %s17, 1
        %p272 = pneg %p38
        %p273 = pneg %p35
        %s274 = smul.u32 2, %s22
        %p275 = scmp.lt.s32.totalorder %s274, 3
        %s276 = scalar_select %p275, %s274, 3
        %s277 = smul.addr %s276, 2
        %s278 = scalar_lea.vmem %s1, %s277
        %p279 = pneg %p64
        %p280 = pneg %p61
        %p281 = pneg %p85
        %p282 = pneg %p82
        %p283 = pneg %p106
        %p284 = pneg %p103
        %p285 = pneg %p127
        %p286 = pneg %p124
        %p287 = pneg %p148
        %p288 = pneg %p145
        %p289 = pneg %p169
        %p290 = pneg %p166
        %p291 = pneg %p190
        %p292 = pneg %p187
        %p293 = pneg %p216
        %p294 = pneg %p213
        %s295 = sand.u32 %s203, 1
        %s296 = scalar_lea.sflag [#allocation3], %s295
        %s297 = sand.u32 %s203, 1
        %s298 = smul.addr %s297, 8
        %s299 = scalar_lea.vmem [#allocation2], %s298
        %s300 = smul.u32 2, %s22
        %p301 = scmp.lt.s32.totalorder %s300, 3
        %s302 = scalar_select %p301, %s300, 3
        %s303 = smul.addr %s302, 2
        %s304 = scalar_lea.vmem %s1, %s303
        %s305 = smul.u32 2, %s22
        %s306 = smul.u32 2, %s22
        %v308 = vld [vmem:[%s304] sm:$0xf]
        %v309 = vld [vmem:[%s2] sm:$0xf]
        %v310 = vld [vmem:[%s2 + $0x4] sm:$0xf]
        %v311 = vld [vmem:[%s2 + $0x8] sm:$0xf]
        %v312 = vld [vmem:[%s2 + $0xc] sm:$0xf]
        %v313 = vld [vmem:[%s2 + $0x10] sm:$0xf]
        %v314 = vld [vmem:[%s2 + $0x14] sm:$0xf]
        %v315 = vld [vmem:[%s2 + $0x18] sm:$0xf]
        %v316 = vld [vmem:[%s2 + $0x1c] sm:$0xf]
        %v317 = vld [vmem:[%s2 + $0x20] sm:$0xf]
        %v318 = vld [vmem:[%s2 + $0x24] sm:$0xf]
        %v319 = vld [vmem:[%s2 + $0x28] sm:$0xf]
        %v320 = vld [vmem:[%s2 + $0x2c] sm:$0xf]
        %v321 = vld [vmem:[%s3] sm:$0xff]
        %v322 = vld [vmem:[%s3 + $0x8] sm:$0xff]
        %v323 = vld [vmem:[%s3 + $0x10] sm:$0xff]
        %v324 = vld [vmem:[%s3 + $0x18] sm:$0xff]
        %v325 = vld [vmem:[%s3 + $0x20] sm:$0xff]
        %v326 = vld [vmem:[%s3 + $0x28] sm:$0xff]
        %v327 = vld [vmem:[%s3 + $0x30] sm:$0xff]
        %v328 = vld [vmem:[%s3 + $0x38] sm:$0xff]
        %v329 = vld [vmem:[%s3 + $0x40] sm:$0xff]
        %v330 = vld [vmem:[%s3 + $0x48] sm:$0xff]
        %v331 = vld [vmem:[%s3 + $0x50] sm:$0xff]
        %v332 = vld [vmem:[%s3 + $0x58] sm:$0xff]
        %334 = vset.pattern.permute.xlu0 0
        %335 = vperm.xlu0 %334, %v321
        %v336 = vpop.permute.xlu0 %335
        %339 = vset.pattern.permute.xlu0 0
        %340 = vperm.xlu0 %339, %v322
        %v341 = vpop.permute.xlu0 %340
        %344 = vset.pattern.permute.xlu0 0
        %345 = vperm.xlu0 %344, %v323
        %v346 = vpop.permute.xlu0 %345
        %349 = vset.pattern.permute.xlu0 0
        %350 = vperm.xlu0 %349, %v324
        %v351 = vpop.permute.xlu0 %350
        %354 = vset.pattern.permute.xlu0 0
        %355 = vperm.xlu0 %354, %v325
        %v356 = vpop.permute.xlu0 %355
        %359 = vset.pattern.permute.xlu0 0
        %360 = vperm.xlu0 %359, %v326
        %v361 = vpop.permute.xlu0 %360
        %364 = vset.pattern.permute.xlu0 0
        %365 = vperm.xlu0 %364, %v327
        %v366 = vpop.permute.xlu0 %365
        %369 = vset.pattern.permute.xlu0 0
        %370 = vperm.xlu0 %369, %v328
        %v371 = vpop.permute.xlu0 %370
        %374 = vset.pattern.permute.xlu0 0
        %375 = vperm.xlu0 %374, %v329
        %v376 = vpop.permute.xlu0 %375
        %379 = vset.pattern.permute.xlu0 0
        %380 = vperm.xlu0 %379, %v330
        %v381 = vpop.permute.xlu0 %380
        %384 = vset.pattern.permute.xlu0 0
        %385 = vperm.xlu0 %384, %v331
        %v386 = vpop.permute.xlu0 %385
        %389 = vset.pattern.permute.xlu0 0
        %390 = vperm.xlu0 %389, %v332
        %v391 = vpop.permute.xlu0 %390
        %v405 = vunpack.c.l.b16 %v309
        %v406 = vunpack.c.l.b16 %v310
        %v407 = vunpack.c.l.b16 %v311
        %v408 = vunpack.c.l.b16 %v312
        %v409 = vunpack.c.l.b16 %v313
        %v410 = vunpack.c.l.b16 %v314
        %v411 = vunpack.c.l.b16 %v315
        %v412 = vunpack.c.l.b16 %v316
        %v413 = vunpack.c.l.b16 %v317
        %v414 = vunpack.c.l.b16 %v318
        %v415 = vunpack.c.l.b16 %v319
        %v416 = vunpack.c.l.b16 %v320
        %v417 = vpack.c.b16 %v406, %v405
        %v418 = vpack.c.b16 %v408, %v407
        %v419 = vpack.c.b16 %v410, %v409
        %v420 = vpack.c.b16 %v412, %v411
        %v421 = vpack.c.b16 %v414, %v413
        %v422 = vpack.c.b16 %v416, %v415
        %424 = vst [vmem:[#allocation1] ss:$4 sm:$0xff] %v308
        %v425 = vld.sshfl [vmem:[#allocation1] sm:$0xff pattern:$0x73625140]
        %v426 = vld.sshfl [vmem:[#allocation1 + $0x8] sm:$0xff pattern:$0x73625140]
        %vm427 = vcmask 31744
        %v429 = vsel %vm427, %v417, 0
        %v432 = vsel %vm427, %v418, 0
        %v435 = vsel %vm427, %v419, 0
        %v438 = vsel %vm427, %v420, 0
        %v441 = vsel %vm427, %v421, 0
        %v444 = vsel %vm427, %v422, 0
        %vm446 = vcmask 1041408
        %v447 = vsel %vm446, %v425, 0
        %v449 = vsel %vm446, %v426, 0
        %451 = vmatpush.bf16.msra.mxu0 0
        %452 = vmatpush.bf16.msra.mxu0 0
        %453 = vmatpush.bf16.msra.mxu0 0
        %454 = vmatpush.bf16.msra.mxu0 0
        %455 = vmatpush.bf16.msra.mxu0 0
        %456 = vmatpush.bf16.msra.mxu0 0
        %457 = vmatpush.bf16.msra.mxu0 0
        %458 = vmatpush.bf16.msra.mxu0 %v447
        %459 = vmatmul.bf16.gmra.mxu0 %v429
        %v460 = vpop.f32.mrf.mxu0
        %v461 = vadd.f32 %v336, %v460
        %v462 = vpop.f32.mrf.mxu0
        %v463 = vadd.f32 %v341, %v462
        %464 = vmatmul.bf16.gmra.mxu0 %v432
        %v465 = vpop.f32.mrf.mxu0
        %v466 = vadd.f32 %v346, %v465
        %v467 = vpop.f32.mrf.mxu0
        %v468 = vadd.f32 %v351, %v467
        %469 = vmatmul.bf16.gmra.mxu0 %v435
        %v470 = vpop.f32.mrf.mxu0
        %v471 = vadd.f32 %v356, %v470
        %v472 = vpop.f32.mrf.mxu0
        %v473 = vadd.f32 %v361, %v472
        %474 = vmatmul.bf16.gmra.mxu0 %v438
        %v475 = vpop.f32.mrf.mxu0
        %v476 = vadd.f32 %v366, %v475
        %v477 = vpop.f32.mrf.mxu0
        %v478 = vadd.f32 %v371, %v477
        %479 = vmatmul.bf16.gmra.mxu0 %v441
        %v480 = vpop.f32.mrf.mxu0
        %v481 = vadd.f32 %v376, %v480
        %v482 = vpop.f32.mrf.mxu0
        %v483 = vadd.f32 %v381, %v482
        %484 = vmatmul.bf16.gmra.mxu0 %v444
        %v485 = vpop.f32.mrf.mxu0
        %v486 = vadd.f32 %v386, %v485
        %v487 = vpop.f32.mrf.mxu0
        %v488 = vadd.f32 %v391, %v487
        %489 = vdwg.mxu0
        %490 = vmatpush.bf16.msra.mxu0 0
        %491 = vmatpush.bf16.msra.mxu0 0
        %492 = vmatpush.bf16.msra.mxu0 0
        %493 = vmatpush.bf16.msra.mxu0 0
        %494 = vmatpush.bf16.msra.mxu0 0
        %495 = vmatpush.bf16.msra.mxu0 0
        %496 = vmatpush.bf16.msra.mxu0 0
        %497 = vmatpush.bf16.msra.mxu0 %v449
        %498 = vmatmul.bf16.gmra.mxu0 %v429
        %v499 = vpop.f32.mrf.mxu0
        %v500 = vadd.f32 %v336, %v499
        %v501 = vpop.f32.mrf.mxu0
        %v502 = vadd.f32 %v341, %v501
        %503 = vmatmul.bf16.gmra.mxu0 %v432
        %v504 = vpop.f32.mrf.mxu0
        %v505 = vadd.f32 %v346, %v504
        %v506 = vpop.f32.mrf.mxu0
        %v507 = vadd.f32 %v351, %v506
        %508 = vmatmul.bf16.gmra.mxu0 %v435
        %v509 = vpop.f32.mrf.mxu0
        %v510 = vadd.f32 %v356, %v509
        %v511 = vpop.f32.mrf.mxu0
        %v512 = vadd.f32 %v361, %v511
        %513 = vmatmul.bf16.gmra.mxu0 %v438
        %v514 = vpop.f32.mrf.mxu0
        %v515 = vadd.f32 %v366, %v514
        %v516 = vpop.f32.mrf.mxu0
        %v517 = vadd.f32 %v371, %v516
        %518 = vmatmul.bf16.gmra.mxu0 %v441
        %v519 = vpop.f32.mrf.mxu0
        %v520 = vadd.f32 %v376, %v519
        %v521 = vpop.f32.mrf.mxu0
        %v522 = vadd.f32 %v381, %v521
        %523 = vmatmul.bf16.gmra.mxu0 %v444
        %v524 = vpop.f32.mrf.mxu0
        %v525 = vadd.f32 %v386, %v524
        %v526 = vpop.f32.mrf.mxu0
        %v527 = vadd.f32 %v391, %v526
        %528 = vdwg.mxu0
        %v529 = vtanh.pop %v461
        %v530 = vtanh.pop %v500
        %v531 = vtanh.pop %v463
        %v532 = vtanh.pop %v502
        %v533 = vtanh.pop %v466
        %v534 = vtanh.pop %v505
        %v535 = vtanh.pop %v468
        %v536 = vtanh.pop %v507
        %v537 = vtanh.pop %v471
        %v538 = vtanh.pop %v510
        %v539 = vtanh.pop %v473
        %v540 = vtanh.pop %v512
        %v541 = vtanh.pop %v476
        %v542 = vtanh.pop %v515
        %v543 = vtanh.pop %v478
        %v544 = vtanh.pop %v517
        %v545 = vtanh.pop %v481
        %v546 = vtanh.pop %v520
        %v547 = vtanh.pop %v483
        %v548 = vtanh.pop %v522
        %v549 = vtanh.pop %v486
        %v550 = vtanh.pop %v525
        %v551 = vtanh.pop %v488
        %v552 = vtanh.pop %v527
        %v553 = vsub.f32 %v545, %v537
        %v554 = vsub.f32 %v546, %v538
        %v555 = vsub.f32 %v547, %v539
        %v556 = vsub.f32 %v548, %v540
        %v557 = vsub.f32 %v549, %v541
        %v558 = vsub.f32 %v550, %v542
        %v559 = vsub.f32 %v551, %v543
        %v560 = vsub.f32 %v552, %v544
        %v561 = vld [vmem:[%s4] sm:$0xf]
        %v562 = vld [vmem:[%s4 + $0x4] sm:$0xf]
        %v563 = vld [vmem:[%s4 + $0x8] sm:$0xf]
        %v564 = vld [vmem:[%s4 + $0xc] sm:$0xf]
        %v565 = vpack.c.bf16 %v531, %v529
        %v566 = vpack.c.bf16 %v532, %v530
        %v567 = vpack.c.bf16 %v535, %v533
        %v568 = vpack.c.bf16 %v536, %v534
        %v569 = vld [vmem:[%s5] sm:$0xff]
        %v570 = vld [vmem:[%s5 + $0x8] sm:$0xff]
        %v571 = vld [vmem:[%s5 + $0x10] sm:$0xff]
        %v572 = vld [vmem:[%s5 + $0x18] sm:$0xff]
        %574 = vset.pattern.permute.xlu0 0
        %575 = vperm.xlu0 %574, %v569
        %v576 = vpop.permute.xlu0 %575
        %579 = vset.pattern.permute.xlu0 0
        %580 = vperm.xlu0 %579, %v570
        %v581 = vpop.permute.xlu0 %580
        %584 = vset.pattern.permute.xlu0 0
        %585 = vperm.xlu0 %584, %v571
        %v586 = vpop.permute.xlu0 %585
        %589 = vset.pattern.permute.xlu0 0
        %590 = vperm.xlu0 %589, %v572
        %v591 = vpop.permute.xlu0 %590
        %v597 = vunpack.c.l.b16 %v561
        %v598 = vunpack.c.l.b16 %v562
        %v599 = vunpack.c.l.b16 %v563
        %v600 = vunpack.c.l.b16 %v564
        %v601 = vpack.c.b16 %v598, %v597
        %v602 = vpack.c.b16 %v600, %v599
        %vm603 = vcmask 261120
        %v605 = vsel %vm603, %v601, 0
        %v608 = vsel %vm603, %v602, 0
        %610 = vmatpush.bf16.msra.mxu0 0
        %611 = vmatpush.bf16.msra.mxu0 0
        %612 = vmatpush.bf16.msra.mxu0 0
        %613 = vmatpush.bf16.msra.mxu0 0
        %614 = vmatpush.bf16.msra.mxu0 0
        %615 = vmatpush.bf16.msra.mxu0 0
        %616 = vmatpush.bf16.msra.mxu0 %v567
        %617 = vmatpush.bf16.msra.mxu0 %v565
        %618 = vmatmul.bf16.gmra.mxu0 %v605
        %v619 = vpop.f32.mrf.mxu0
        %v620 = vadd.f32 %v576, %v619
        %v621 = vpop.f32.mrf.mxu0
        %v622 = vadd.f32 %v581, %v621
        %623 = vmatmul.bf16.gmra.mxu0 %v608
        %v624 = vpop.f32.mrf.mxu0
        %v625 = vadd.f32 %v586, %v624
        %v626 = vpop.f32.mrf.mxu0
        %v627 = vadd.f32 %v591, %v626
        %628 = vdwg.mxu0
        %629 = vmatpush.bf16.msra.mxu0 0
        %630 = vmatpush.bf16.msra.mxu0 0
        %631 = vmatpush.bf16.msra.mxu0 0
        %632 = vmatpush.bf16.msra.mxu0 0
        %633 = vmatpush.bf16.msra.mxu0 0
        %634 = vmatpush.bf16.msra.mxu0 0
        %635 = vmatpush.bf16.msra.mxu0 %v568
        %636 = vmatpush.bf16.msra.mxu0 %v566
        %637 = vmatmul.bf16.gmra.mxu0 %v605
        %v638 = vpop.f32.mrf.mxu0
        %v639 = vadd.f32 %v576, %v638
        %v640 = vpop.f32.mrf.mxu0
        %v641 = vadd.f32 %v581, %v640
        %642 = vmatmul.bf16.gmra.mxu0 %v608
        %v643 = vpop.f32.mrf.mxu0
        %v644 = vadd.f32 %v586, %v643
        %v645 = vpop.f32.mrf.mxu0
        %v646 = vadd.f32 %v591, %v645
        %647 = vdwg.mxu0
        %v648 = vtanh.pop %v620
        %v649 = vtanh.pop %v639
        %v650 = vtanh.pop %v622
        %v651 = vtanh.pop %v641
        %v652 = vtanh.pop %v625
        %v653 = vtanh.pop %v644
        %v654 = vtanh.pop %v627
        %v655 = vtanh.pop %v646
        %v656 = vmul.f32 %v648, %v553
        %v657 = vmul.f32 %v649, %v554
        %v658 = vmul.f32 %v650, %v555
        %v659 = vmul.f32 %v651, %v556
        %v660 = vmul.f32 %v652, %v557
        %v661 = vmul.f32 %v653, %v558
        %v662 = vmul.f32 %v654, %v559
        %v663 = vmul.f32 %v655, %v560
        %v664 = vadd.f32 %v537, %v656
        %v665 = vadd.f32 %v538, %v657
        %v666 = vadd.f32 %v539, %v658
        %v667 = vadd.f32 %v540, %v659
        %v668 = vadd.f32 %v541, %v660
        %v669 = vadd.f32 %v542, %v661
        %v670 = vadd.f32 %v543, %v662
        %v671 = vadd.f32 %v544, %v663
        %s672 = scalar_lea.vmem %s4, 16
        %v673 = vld [vmem:[%s672] sm:$0xf]
        %v674 = vld [vmem:[%s672 + $0x4] sm:$0xf]
        %v675 = vld [vmem:[%s672 + $0x8] sm:$0xf]
        %v676 = vld [vmem:[%s672 + $0xc] sm:$0xf]
        %v677 = vpack.c.bf16 %v666, %v664
        %v678 = vpack.c.bf16 %v667, %v665
        %v679 = vpack.c.bf16 %v670, %v668
        %v680 = vpack.c.bf16 %v671, %v669
        %s681 = scalar_lea.vmem %s5, 32
        %v682 = vld [vmem:[%s681] sm:$0xff]
        %v683 = vld [vmem:[%s681 + $0x8] sm:$0xff]
        %v684 = vld [vmem:[%s681 + $0x10] sm:$0xff]
        %v685 = vld [vmem:[%s681 + $0x18] sm:$0xff]
        %687 = vset.pattern.permute.xlu0 0
        %688 = vperm.xlu0 %687, %v682
        %v689 = vpop.permute.xlu0 %688
        %692 = vset.pattern.permute.xlu0 0
        %693 = vperm.xlu0 %692, %v683
        %v694 = vpop.permute.xlu0 %693
        %697 = vset.pattern.permute.xlu0 0
        %698 = vperm.xlu0 %697, %v684
        %v699 = vpop.permute.xlu0 %698
        %702 = vset.pattern.permute.xlu0 0
        %703 = vperm.xlu0 %702, %v685
        %v704 = vpop.permute.xlu0 %703
        %v710 = vunpack.c.l.b16 %v673
        %v711 = vunpack.c.l.b16 %v674
        %v712 = vunpack.c.l.b16 %v675
        %v713 = vunpack.c.l.b16 %v676
        %v714 = vpack.c.b16 %v711, %v710
        %v715 = vpack.c.b16 %v713, %v712
        %v717 = vsel %vm603, %v714, 0
        %v720 = vsel %vm603, %v715, 0
        %722 = vmatpush.bf16.msra.mxu0 0
        %723 = vmatpush.bf16.msra.mxu0 0
        %724 = vmatpush.bf16.msra.mxu0 0
        %725 = vmatpush.bf16.msra.mxu0 0
        %726 = vmatpush.bf16.msra.mxu0 0
        %727 = vmatpush.bf16.msra.mxu0 0
        %728 = vmatpush.bf16.msra.mxu0 %v679
        %729 = vmatpush.bf16.msra.mxu0 %v677
        %730 = vmatmul.bf16.gmra.mxu0 %v717
        %v731 = vpop.f32.mrf.mxu0
        %v732 = vadd.f32 %v689, %v731
        %v733 = vpop.f32.mrf.mxu0
        %v734 = vadd.f32 %v694, %v733
        %735 = vmatmul.bf16.gmra.mxu0 %v720
        %v736 = vpop.f32.mrf.mxu0
        %v737 = vadd.f32 %v699, %v736
        %v738 = vpop.f32.mrf.mxu0
        %v739 = vadd.f32 %v704, %v738
        %740 = vdwg.mxu0
        %741 = vmatpush.bf16.msra.mxu0 0
        %742 = vmatpush.bf16.msra.mxu0 0
        %743 = vmatpush.bf16.msra.mxu0 0
        %744 = vmatpush.bf16.msra.mxu0 0
        %745 = vmatpush.bf16.msra.mxu0 0
        %746 = vmatpush.bf16.msra.mxu0 0
        %747 = vmatpush.bf16.msra.mxu0 %v680
        %748 = vmatpush.bf16.msra.mxu0 %v678
        %749 = vmatmul.bf16.gmra.mxu0 %v717
        %v750 = vpop.f32.mrf.mxu0
        %v751 = vadd.f32 %v689, %v750
        %v752 = vpop.f32.mrf.mxu0
        %v753 = vadd.f32 %v694, %v752
        %754 = vmatmul.bf16.gmra.mxu0 %v720
        %v755 = vpop.f32.mrf.mxu0
        %v756 = vadd.f32 %v699, %v755
        %v757 = vpop.f32.mrf.mxu0
        %v758 = vadd.f32 %v704, %v757
        %759 = vdwg.mxu0
        %v760 = vtanh.pop %v732
        %v761 = vtanh.pop %v751
        %v762 = vtanh.pop %v734
        %v763 = vtanh.pop %v753
        %v764 = vtanh.pop %v737
        %v765 = vtanh.pop %v756
        %v766 = vtanh.pop %v739
        %v767 = vtanh.pop %v758
        %v768 = vmul.f32 %v760, %v553
        %v769 = vmul.f32 %v761, %v554
        %v770 = vmul.f32 %v762, %v555
        %v771 = vmul.f32 %v763, %v556
        %v772 = vmul.f32 %v764, %v557
        %v773 = vmul.f32 %v765, %v558
        %v774 = vmul.f32 %v766, %v559
        %v775 = vmul.f32 %v767, %v560
        %v776 = vadd.f32 %v537, %v768
        %v777 = vadd.f32 %v538, %v769
        %v778 = vadd.f32 %v539, %v770
        %v779 = vadd.f32 %v540, %v771
        %v780 = vadd.f32 %v541, %v772
        %v781 = vadd.f32 %v542, %v773
        %v782 = vadd.f32 %v543, %v774
        %v783 = vadd.f32 %v544, %v775
        %s784 = scalar_lea.vmem %s4, 32
        %v785 = vld [vmem:[%s784] sm:$0xf]
        %v786 = vld [vmem:[%s784 + $0x4] sm:$0xf]
        %v787 = vld [vmem:[%s784 + $0x8] sm:$0xf]
        %v788 = vld [vmem:[%s784 + $0xc] sm:$0xf]
        %v789 = vpack.c.bf16 %v778, %v776
        %v790 = vpack.c.bf16 %v779, %v777
        %v791 = vpack.c.bf16 %v782, %v780
        %v792 = vpack.c.bf16 %v783, %v781
        %s793 = scalar_lea.vmem %s5, 64
        %v794 = vld [vmem:[%s793] sm:$0xff]
        %v795 = vld [vmem:[%s793 + $0x8] sm:$0xff]
        %v796 = vld [vmem:[%s793 + $0x10] sm:$0xff]
        %v797 = vld [vmem:[%s793 + $0x18] sm:$0xff]
        %799 = vset.pattern.permute.xlu0 0
        %800 = vperm.xlu0 %799, %v794
        %v801 = vpop.permute.xlu0 %800
        %804 = vset.pattern.permute.xlu0 0
        %805 = vperm.xlu0 %804, %v795
        %v806 = vpop.permute.xlu0 %805
        %809 = vset.pattern.permute.xlu0 0
        %810 = vperm.xlu0 %809, %v796
        %v811 = vpop.permute.xlu0 %810
        %814 = vset.pattern.permute.xlu0 0
        %815 = vperm.xlu0 %814, %v797
        %v816 = vpop.permute.xlu0 %815
        %v822 = vunpack.c.l.b16 %v785
        %v823 = vunpack.c.l.b16 %v786
        %v824 = vunpack.c.l.b16 %v787
        %v825 = vunpack.c.l.b16 %v788
        %v826 = vpack.c.b16 %v823, %v822
        %v827 = vpack.c.b16 %v825, %v824
        %v829 = vsel %vm603, %v826, 0
        %v832 = vsel %vm603, %v827, 0
        %834 = vmatpush.bf16.msra.mxu0 0
        %835 = vmatpush.bf16.msra.mxu0 0
        %836 = vmatpush.bf16.msra.mxu0 0
        %837 = vmatpush.bf16.msra.mxu0 0
        %838 = vmatpush.bf16.msra.mxu0 0
        %839 = vmatpush.bf16.msra.mxu0 0
        %840 = vmatpush.bf16.msra.mxu0 %v791
        %841 = vmatpush.bf16.msra.mxu0 %v789
        %842 = vmatmul.bf16.gmra.mxu0 %v829
        %v843 = vpop.f32.mrf.mxu0
        %v844 = vadd.f32 %v801, %v843
        %v845 = vpop.f32.mrf.mxu0
        %v846 = vadd.f32 %v806, %v845
        %847 = vmatmul.bf16.gmra.mxu0 %v832
        %v848 = vpop.f32.mrf.mxu0
        %v849 = vadd.f32 %v811, %v848
        %v850 = vpop.f32.mrf.mxu0
        %v851 = vadd.f32 %v816, %v850
        %852 = vdwg.mxu0
        %853 = vmatpush.bf16.msra.mxu0 0
        %854 = vmatpush.bf16.msra.mxu0 0
        %855 = vmatpush.bf16.msra.mxu0 0
        %856 = vmatpush.bf16.msra.mxu0 0
        %857 = vmatpush.bf16.msra.mxu0 0
        %858 = vmatpush.bf16.msra.mxu0 0
        %859 = vmatpush.bf16.msra.mxu0 %v792
        %860 = vmatpush.bf16.msra.mxu0 %v790
        %861 = vmatmul.bf16.gmra.mxu0 %v829
        %v862 = vpop.f32.mrf.mxu0
        %v863 = vadd.f32 %v801, %v862
        %v864 = vpop.f32.mrf.mxu0
        %v865 = vadd.f32 %v806, %v864
        %866 = vmatmul.bf16.gmra.mxu0 %v832
        %v867 = vpop.f32.mrf.mxu0
        %v868 = vadd.f32 %v811, %v867
        %v869 = vpop.f32.mrf.mxu0
        %v870 = vadd.f32 %v816, %v869
        %871 = vdwg.mxu0
        %v872 = vtanh.pop %v844
        %v873 = vtanh.pop %v863
        %v874 = vtanh.pop %v846
        %v875 = vtanh.pop %v865
        %v876 = vtanh.pop %v849
        %v877 = vtanh.pop %v868
        %v878 = vtanh.pop %v851
        %v879 = vtanh.pop %v870
        %v880 = vmul.f32 %v872, %v553
        %v881 = vmul.f32 %v873, %v554
        %v882 = vmul.f32 %v874, %v555
        %v883 = vmul.f32 %v875, %v556
        %v884 = vmul.f32 %v876, %v557
        %v885 = vmul.f32 %v877, %v558
        %v886 = vmul.f32 %v878, %v559
        %v887 = vmul.f32 %v879, %v560
        %v888 = vadd.f32 %v537, %v880
        %v889 = vadd.f32 %v538, %v881
        %v890 = vadd.f32 %v539, %v882
        %v891 = vadd.f32 %v540, %v883
        %v892 = vadd.f32 %v541, %v884
        %v893 = vadd.f32 %v542, %v885
        %v894 = vadd.f32 %v543, %v886
        %v895 = vadd.f32 %v544, %v887
        %v896 = vld [vmem:[%s6] sm:$0xf]
        %v897 = vld [vmem:[%s6 + $0x4] sm:$0xf]
        %v898 = vpack.c.bf16 %v890, %v888
        %v899 = vpack.c.bf16 %v891, %v889
        %v900 = vpack.c.bf16 %v894, %v892
        %v901 = vpack.c.bf16 %v895, %v893
        %v902 = vld [vmem:[%s7] sm:$0xff]
        %v903 = vld [vmem:[%s7 + $0x8] sm:$0xff]
        %905 = vset.pattern.permute.xlu0 0
        %906 = vperm.xlu0 %905, %v902
        %v907 = vpop.permute.xlu0 %906
        %910 = vset.pattern.permute.xlu0 0
        %911 = vperm.xlu0 %910, %v903
        %v912 = vpop.permute.xlu0 %911
        %v916 = vunpack.c.l.b16 %v896
        %v917 = vunpack.c.l.b16 %v897
        %v918 = vpack.c.b16 %v917, %v916
        %v920 = vsel %vm603, %v918, 0
        %922 = vmatpush.bf16.msra.mxu0 0
        %923 = vmatpush.bf16.msra.mxu0 0
        %924 = vmatpush.bf16.msra.mxu0 0
        %925 = vmatpush.bf16.msra.mxu0 0
        %926 = vmatpush.bf16.msra.mxu0 0
        %927 = vmatpush.bf16.msra.mxu0 0
        %928 = vmatpush.bf16.msra.mxu0 %v900
        %929 = vmatpush.bf16.msra.mxu0 %v898
        %930 = vmatmul.bf16.gmra.mxu0 %v920
        %v931 = vpop.f32.mrf.mxu0
        %v932 = vadd.f32 %v907, %v931
        %v933 = vpop.f32.mrf.mxu0
        %v934 = vadd.f32 %v912, %v933
        %935 = vdwg.mxu0
        %936 = vmatpush.bf16.msra.mxu0 0
        %937 = vmatpush.bf16.msra.mxu0 0
        %938 = vmatpush.bf16.msra.mxu0 0
        %939 = vmatpush.bf16.msra.mxu0 0
        %940 = vmatpush.bf16.msra.mxu0 0
        %941 = vmatpush.bf16.msra.mxu0 0
        %942 = vmatpush.bf16.msra.mxu0 %v901
        %943 = vmatpush.bf16.msra.mxu0 %v899
        %944 = vmatmul.bf16.gmra.mxu0 %v920
        %v945 = vpop.f32.mrf.mxu0
        %v946 = vadd.f32 %v907, %v945
        %v947 = vpop.f32.mrf.mxu0
        %v948 = vadd.f32 %v912, %v947
        %949 = vdwg.mxu0
        %v950 = vtanh.pop %v932
        %v951 = vtanh.pop %v946
        %v952 = vtanh.pop %v934
        %v953 = vtanh.pop %v948
        %v954 = vld [vmem:[%s0] sm:$0xf]
        %vm955 = vcmask 130048
        %v957 = vsel %vm955, %v954, 0
        %959 = vmatpush.msra.mxu0 0.0
        %960 = vmatpush.msra.mxu0 0.0
        %961 = vmatpush.msra.mxu0 0.0
        %962 = vmatpush.msra.mxu0 0.0
        %963 = vmatpush.msra.mxu0 0.0
        %964 = vmatpush.msra.mxu0 0.0
        %965 = vmatpush.msra.mxu0 0.0
        %966 = vmatpush.msra.mxu0 0.0
        %967 = vmatpush.msra.mxu0 0.0
        %968 = vmatpush.msra.mxu0 0.0
        %969 = vmatpush.msra.mxu0 0.0
        %970 = vmatpush.msra.mxu0 0.0
        %971 = vmatpush.msra.mxu0 0.0
        %972 = vmatpush.msra.mxu0 0.0
        %973 = vmatpush.msra.mxu0 %v952
        %974 = vmatpush.msra.mxu0 %v950
        %975 = vmatmul.f32.gmra.mxu0 %v957
        %v976 = vpop.f32.mrf.mxu0
        %v977 = vadd.f32 0.0, %v976
        %978 = vdwg.mxu0
        %979 = vmatpush.msra.mxu0 0.0
        %980 = vmatpush.msra.mxu0 0.0
        %981 = vmatpush.msra.mxu0 0.0
        %982 = vmatpush.msra.mxu0 0.0
        %983 = vmatpush.msra.mxu0 0.0
        %984 = vmatpush.msra.mxu0 0.0
        %985 = vmatpush.msra.mxu0 0.0
        %986 = vmatpush.msra.mxu0 0.0
        %987 = vmatpush.msra.mxu0 0.0
        %988 = vmatpush.msra.mxu0 0.0
        %989 = vmatpush.msra.mxu0 0.0
        %990 = vmatpush.msra.mxu0 0.0
        %991 = vmatpush.msra.mxu0 0.0
        %992 = vmatpush.msra.mxu0 0.0
        %993 = vmatpush.msra.mxu0 %v953
        %994 = vmatpush.msra.mxu0 %v951
        %995 = vmatmul.f32.gmra.mxu0 %v957
        %v996 = vpop.f32.mrf.mxu0
        %v997 = vadd.f32 0.0, %v996
        %998 = vdwg.mxu0
        %v1001 = vrot.slane %v997, 4
        %vm1002 = vcmask 1043456
        %v1003 = vsel %vm1002, %v977, %v1001
        %1005 = vst [vmem:[%s299] sm:$0xff] %v1003
        %s1006 = sand.u32 %s203, 1
        %s1007 = scalar_lea.sflag [#allocation3], %s1006
        %s1008 = sand.u32 %s203, 1
        %s1009 = smul.addr %s1008, 8
        %s1010 = scalar_lea.vmem [#allocation2], %s1009
        // Predicated region
        $region53: #{tpu_custom_call.1} parent=51 // pred_check
          %p1011 = pneg %p213
        $region54: #{tpu_custom_call.1} parent=51 // pred_check_branch
          %1013 = sbr.rel (%p1011) target = $region56
        $region55: #{tpu_custom_call.1} parent=51 // pred_region
          %s1014 = smul.u32 2, %s22
          %1016 = vsyncadd %s1007, 0
          %s1017 = smul.addr %s1014, 4
          %s1018 = scalar_lea.hbm %s8, %s1017
          %s1020 = sshll.u32 %s1010, 4
          %s1021 = int_to_ptr.vmem [resolvable:$true] %s1020
          %s1022 = sshll.u32 %s1018, 4
          %s1023 = int_to_ptr.hbm [resolvable:$true] %s1022
          %1025 = dma.vmem_to_hbm [thread:$0]  %s1021, 128, %s1023, %s1007
        $region56: #{tpu_custom_call.1} parent=51 // pred_fallthru
          _
      $region52: #{tpu_custom_call.1} parent=5 // pred_fallthru
        _
      %p1026 = scmp.le.s32.totalorder 2, %s17
      // Predicated region
      $region57: #{tpu_custom_call.1} parent=5 // pred_check
        %p1027 = pneg %p1026
      $region58: #{tpu_custom_call.1} parent=5 // pred_check_branch
        %1029 = sbr.rel (%p1027) target = $region60
      $region59: #{tpu_custom_call.1} parent=5 // pred_region
        %s1030 = ssub.s32 %s17, 2
        // Predicated region
        $region61: #{tpu_custom_call.1} parent=59 // pred_check
          %p1031 = pneg %p219
        $region62: #{tpu_custom_call.1} parent=59 // pred_check_branch
          %1033 = sbr.rel (%p1031) target = $region64
        $region63: #{tpu_custom_call.1} parent=59 // pred_region
          %s1034 = sand.u32 %s204, 1
          %s1035 = scalar_lea.sflag [#allocation3], %s1034
          %s1036 = sand.u32 %s204, 1
          %s1037 = smul.addr %s1036, 8
          %s1038 = scalar_lea.vmem [#allocation2], %s1037
          %1040 = dma.done %s1035, 128
        $region64: #{tpu_custom_call.1} parent=59 // pred_fallthru
          _
      $region60: #{tpu_custom_call.1} parent=5 // pred_fallthru
        _
    $region6: #{tpu_custom_call.1} parent=1 // loop_footer
      %s21 = sadd.s32 1, %s17
    $region7: #{tpu_custom_call.1} parent=1 // loop_footer_branch
      %16 = sbr.rel target = $region3
    $region8: #{tpu_custom_call.1} parent=1 // loop_exit
      _
    %1041 = vsyncpa [#allocation3], 1
    %s1042 = scalar_lea.sflag [#allocation3], 1
    %1043 = vsyncpa %s1042, 1

</llo_original>
